<compile_context>
chip_gen: v6e
topology: v6e:2x2x1
jax: 0.10.0
libtpu: 0.0.40
codegen_flags: <defaults>
</compile_context>

<pallas_src>
import functools

import jax
import jax.numpy as jnp
from jax.experimental import pallas as pl
from jax.experimental.pallas import tpu as pltpu


def _round_up(x, m):
    return (x + m - 1) // m * m


def ffn_kernel(x_ref, w1_ref, b1_ref, w2_ref, b2_ref, gamma_ref, beta_ref, o_ref,
               *, d_in, eps, matmul_dtype):
    # x_ref: (tm, d_in_p) f32 row tile; weights/params are full-resident VMEM arrays.
    x = x_ref[...]                                    # f32, kept for the residual

    # ----- w_1 + ReLU : bf16 MXU matmul, f32 accumulation, f32 epilogue -----
    h = jnp.dot(x.astype(matmul_dtype), w1_ref[...],
                preferred_element_type=jnp.float32) + b1_ref[...]
    h = jnp.maximum(h, 0.0)

    # ----- w_2 : bf16 MXU matmul, f32 accumulation -----
    y = jnp.dot(h.astype(matmul_dtype), w2_ref[...],
                preferred_element_type=jnp.float32) + b2_ref[...]

    # TODO(synk): dropout(p=0.1) is identity in eval mode; training-time dropout
    # would use pltpu.prng_seed / pltpu.prng_random_bits here.

    # ----- residual add (f32); padded lanes of x and y are exactly zero -----
    y = y + x

    # ----- LayerNorm over the real d_in lanes.  Padded lanes are zero, so plain
    # sums over the padded width divided by d_in give exact statistics; variance
    # via E[y^2] - mean^2 reuses the sums and needs no lane masking. -----
    inv_n = 1.0 / d_in
    mean = jnp.sum(y, axis=-1, keepdims=True) * inv_n
    var = jnp.sum(y * y, axis=-1, keepdims=True) * inv_n - mean * mean
    norm = (y - mean) * jax.lax.rsqrt(var + eps)
    o_ref[...] = (norm * gamma_ref[...] + beta_ref[...]).astype(o_ref.dtype)


def positionwise_feed_forward(x, w1, b1, w2, b2, gamma, beta, *,
                              tm=512, matmul_dtype=jnp.bfloat16, eps=1e-6):
    """x: (B, S, d_in). Returns (B, S, d_in) in x.dtype (eval-mode forward)."""
    B, S, d_in = x.shape
    d_hid = w1.shape[1]
    M = B * S

    # Lane-dense feature dims (multiples of 128); row tile multiple of 8,
    # shrunk for tiny inputs so we don't blow up the toy test.
    d_in_p = _round_up(d_in, 128)
    d_hid_p = _round_up(d_hid, 128)
    tm = max(8, min(tm, _round_up(M, 8)))
    M_p = _round_up(M, tm)

    f32 = jnp.float32
    x2d = jnp.pad(x.reshape(M, d_in).astype(f32),
                  ((0, M_p - M), (0, d_in_p - d_in)))
    w1_p = jnp.pad(w1.astype(f32), ((0, d_in_p - d_in), (0, d_hid_p - d_hid))
                   ).astype(matmul_dtype)
    w2_p = jnp.pad(w2.astype(f32), ((0, d_hid_p - d_hid), (0, d_in_p - d_in))
                   ).astype(matmul_dtype)
    b1_p = jnp.pad(b1.astype(f32), (0, d_hid_p - d_hid)).reshape(1, d_hid_p)
    b2_p = jnp.pad(b2.astype(f32), (0, d_in_p - d_in)).reshape(1, d_in_p)
    gamma_p = jnp.pad(gamma.astype(f32), (0, d_in_p - d_in)).reshape(1, d_in_p)
    beta_p = jnp.pad(beta.astype(f32), (0, d_in_p - d_in)).reshape(1, d_in_p)

    # Explicit VMEM budget: resident bf16 weights + small params + double-buffered
    # x/out tiles + hidden intermediate, with headroom; capped at 64 MiB (v7x-safe).
    mm_bytes = jnp.dtype(matmul_dtype).itemsize
    vmem_est = (
        2 * d_in_p * d_hid_p * mm_bytes            # w1 + w2 resident
        + (d_hid_p + 3 * d_in_p) * 4               # b1, b2, gamma, beta
        + 2 * 2 * tm * d_in_p * 4                  # double-buffered x + out tiles
        + 3 * tm * d_hid_p * 4                     # hidden activation + bf16 casts
    )
    vmem_limit = int(min(max(2 * vmem_est, 32 * 1024 * 1024), 64 * 1024 * 1024))

    kernel = functools.partial(ffn_kernel, d_in=d_in, eps=eps,
                               matmul_dtype=matmul_dtype)
    # Full-resident VMEM operands (constant across the grid -> no double buffering).
    resident = pl.BlockSpec(memory_space=pltpu.MemorySpace.VMEM)

    out2d = pl.pallas_call(
        kernel,
        out_shape=jax.ShapeDtypeStruct((M_p, d_in_p), x.dtype),
        grid_spec=pltpu.PrefetchScalarGridSpec(
            num_scalar_prefetch=0,
            grid=(M_p // tm,),
            in_specs=[
                pl.BlockSpec((tm, d_in_p), lambda i: (i, 0)),   # x row tile (pipelined)
                resident,                                       # w1 (bf16, full)
                resident,                                       # b1
                resident,                                       # w2 (bf16, full)
                resident,                                       # b2
                resident,                                       # layer_norm gamma
                resident,                                       # layer_norm beta
            ],
            out_specs=pl.BlockSpec((tm, d_in_p), lambda i: (i, 0)),
        ),
        compiler_params=pltpu.CompilerParams(
            dimension_semantics=("parallel",),     # shards rows across TCs on v7x
            vmem_limit_bytes=vmem_limit,
        ),
    )(x2d, w1_p, b1_p, w2_p, b2_p, gamma_p, beta_p)

    return out2d[:M, :d_in].reshape(B, S, d_in)


def _reference_bf16(x, w1, b1, w2, b2, gamma, beta, *, eps=1e-6,
                    matmul_dtype=jnp.bfloat16):
    # Mirrors the kernel numerics: bf16 matmuls w/ f32 accumulation, f32 epilogue.
    h = jnp.dot(x.astype(matmul_dtype), w1.astype(matmul_dtype),
                preferred_element_type=jnp.float32) + b1
    h = jnp.maximum(h, 0.0)
    y = jnp.dot(h.astype(matmul_dtype), w2.astype(matmul_dtype),
                preferred_element_type=jnp.float32) + b2
    y = y + x
    mean = jnp.mean(y, axis=-1, keepdims=True)
    var = jnp.mean((y - mean) ** 2, axis=-1, keepdims=True)
    return (y - mean) * jax.lax.rsqrt(var + eps) * gamma + beta


def _reference_f32(x, w1, b1, w2, b2, gamma, beta, *, eps=1e-6):
    # Pure-f32 torch-equivalent forward (dropout in eval -> identity).
    h = jnp.maximum(x @ w1 + b1, 0.0)
    y = h @ w2 + b2 + x
    mean = jnp.mean(y, axis=-1, keepdims=True)
    var = jnp.mean((y - mean) ** 2, axis=-1, keepdims=True)
    return (y - mean) * jax.lax.rsqrt(var + eps) * gamma + beta


if __name__ == "__main__":
    B, S, d_in, d_hid = 2, 8, 32, 64

    key = jax.random.PRNGKey(0)
    kx, kw1, kb1, kw2, kb2 = jax.random.split(key, 5)

    x = jax.random.normal(kx, (B, S, d_in), dtype=jnp.float32)

    # Deterministic parameter init (uniform +/- 1/sqrt(fan_in), torch-Linear-like).
    lim1 = 1.0 / jnp.sqrt(d_in)
    lim2 = 1.0 / jnp.sqrt(d_hid)
    w1 = jax.random.uniform(kw1, (d_in, d_hid), jnp.float32, -lim1, lim1)
    b1 = jax.random.uniform(kb1, (d_hid,), jnp.float32, -lim1, lim1)
    w2 = jax.random.uniform(kw2, (d_hid, d_in), jnp.float32, -lim2, lim2)
    b2 = jax.random.uniform(kb2, (d_in,), jnp.float32, -lim2, lim2)
    gamma = jnp.ones((d_in,), jnp.float32)
    beta = jnp.zeros((d_in,), jnp.float32)

    out = positionwise_feed_forward(x, w1, b1, w2, b2, gamma, beta)
    out = jax.block_until_ready(out)
    assert out.shape == (B, S, d_in)

    # Exact-numerics check against a reference using the same bf16-matmul recipe.
    ref_bf16 = _reference_bf16(x, w1, b1, w2, b2, gamma, beta)
    assert jnp.allclose(out, ref_bf16, atol=1e-3, rtol=1e-3), "mismatch vs bf16 reference"

    # Semantics check against the pure-f32 torch forward (bf16 matmul rounding only).
    ref_f32 = _reference_f32(x, w1, b1, w2, b2, gamma, beta)
    assert jnp.allclose(out, ref_f32, atol=5e-2, rtol=5e-2), "mismatch vs f32 reference"

    print("KERNEL_OK")
</pallas_src>

<mosaic_0001>
module attributes {stable_mosaic.version = 11 : i64} {
  func.func @ffn_kernel(%arg0: i32, %arg1: memref<16x128xf32, #tpu.memory_space<vmem>>, %arg2: memref<128x128xbf16, #tpu.memory_space<vmem>>, %arg3: memref<1x128xf32, #tpu.memory_space<vmem>>, %arg4: memref<128x128xbf16, #tpu.memory_space<vmem>>, %arg5: memref<1x128xf32, #tpu.memory_space<vmem>>, %arg6: memref<1x128xf32, #tpu.memory_space<vmem>>, %arg7: memref<1x128xf32, #tpu.memory_space<vmem>>, %arg8: memref<16x128xf32, #tpu.memory_space<vmem>>) attributes {dimension_semantics = [#tpu.dimension_semantics<parallel>], iteration_bounds = array<i64: 1>, scalar_prefetch = 0 : i64, scratch_operands = 0 : i64, tpu.core_type = #tpu.core_type<tc>, window_params = [{transform_indices = @transform_0, window_bounds = array<i64: 16, 128>}, {pipeline_mode = #tpu.pipeline_mode<synchronous>, transform_indices = @transform_1, window_bounds = array<i64: 128, 128>}, {pipeline_mode = #tpu.pipeline_mode<synchronous>, transform_indices = @transform_2, window_bounds = array<i64: 1, 128>}, {pipeline_mode = #tpu.pipeline_mode<synchronous>, transform_indices = @transform_3, window_bounds = array<i64: 128, 128>}, {pipeline_mode = #tpu.pipeline_mode<synchronous>, transform_indices = @transform_4, window_bounds = array<i64: 1, 128>}, {pipeline_mode = #tpu.pipeline_mode<synchronous>, transform_indices = @transform_5, window_bounds = array<i64: 1, 128>}, {pipeline_mode = #tpu.pipeline_mode<synchronous>, transform_indices = @transform_6, window_bounds = array<i64: 1, 128>}, {transform_indices = @transform_7, window_bounds = array<i64: 16, 128>}]} {
    %c0 = arith.constant 0 : index
    %c0_0 = arith.constant 0 : index
    %0 = vector.load %arg1[%c0, %c0_0] : memref<16x128xf32, #tpu.memory_space<vmem>>, vector<16x128xf32>
    %1 = arith.truncf %0 : vector<16x128xf32> to vector<16x128xbf16>
    %c0_1 = arith.constant 0 : index
    %c0_2 = arith.constant 0 : index
    %2 = vector.load %arg2[%c0_1, %c0_2] : memref<128x128xbf16, #tpu.memory_space<vmem>>, vector<128x128xbf16>
    %cst = arith.constant dense<0.000000e+00> : vector<16x128xf32>
    %3 = tpu.matmul %1, %2, %cst {dimension_numbers = #tpu.dot_dimension_numbers<[1], [0], [0], [1], [0, 0, 1, 1], [], []>} : vector<16x128xbf16>, vector<128x128xbf16>, vector<16x128xf32> -> vector<16x128xf32>
    %c0_3 = arith.constant 0 : index
    %c0_4 = arith.constant 0 : index
    %4 = vector.load %arg3[%c0_3, %c0_4] : memref<1x128xf32, #tpu.memory_space<vmem>>, vector<1x128xf32>
    %5 = vector.broadcast %4 : vector<1x128xf32> to vector<16x128xf32>
    %6 = arith.addf %3, %5 : vector<16x128xf32>
    %cst_5 = arith.constant 0.000000e+00 : f32
    %7 = vector.broadcast %cst_5 : f32 to vector<16x128xf32>
    %8 = arith.maximumf %6, %7 : vector<16x128xf32>
    %9 = arith.truncf %8 : vector<16x128xf32> to vector<16x128xbf16>
    %c0_6 = arith.constant 0 : index
    %c0_7 = arith.constant 0 : index
    %10 = vector.load %arg4[%c0_6, %c0_7] : memref<128x128xbf16, #tpu.memory_space<vmem>>, vector<128x128xbf16>
    %cst_8 = arith.constant dense<0.000000e+00> : vector<16x128xf32>
    %11 = tpu.matmul %9, %10, %cst_8 {dimension_numbers = #tpu.dot_dimension_numbers<[1], [0], [0], [1], [0, 0, 1, 1], [], []>} : vector<16x128xbf16>, vector<128x128xbf16>, vector<16x128xf32> -> vector<16x128xf32>
    %c0_9 = arith.constant 0 : index
    %c0_10 = arith.constant 0 : index
    %12 = vector.load %arg5[%c0_9, %c0_10] : memref<1x128xf32, #tpu.memory_space<vmem>>, vector<1x128xf32>
    %13 = vector.broadcast %12 : vector<1x128xf32> to vector<16x128xf32>
    %14 = arith.addf %11, %13 : vector<16x128xf32>
    %15 = arith.addf %14, %0 : vector<16x128xf32>
    %cst_11 = arith.constant dense<0.000000e+00> : vector<16xf32>
    %16 = vector.multi_reduction <add>, %15, %cst_11 [1] : vector<16x128xf32> to vector<16xf32>
    %17 = vector.shape_cast %16 : vector<16xf32> to vector<16x1xf32>
    %cst_12 = arith.constant 3.125000e-02 : f32
    %18 = vector.broadcast %cst_12 : f32 to vector<16x1xf32>
    %19 = arith.mulf %17, %18 : vector<16x1xf32>
    %20 = arith.mulf %15, %15 : vector<16x128xf32>
    %cst_13 = arith.constant dense<0.000000e+00> : vector<16xf32>
    %21 = vector.multi_reduction <add>, %20, %cst_13 [1] : vector<16x128xf32> to vector<16xf32>
    %22 = vector.shape_cast %21 : vector<16xf32> to vector<16x1xf32>
    %cst_14 = arith.constant 3.125000e-02 : f32
    %23 = vector.broadcast %cst_14 : f32 to vector<16x1xf32>
    %24 = arith.mulf %22, %23 : vector<16x1xf32>
    %25 = arith.mulf %19, %19 : vector<16x1xf32>
    %26 = arith.subf %24, %25 : vector<16x1xf32>
    %27 = vector.broadcast %19 : vector<16x1xf32> to vector<16x128xf32>
    %28 = arith.subf %15, %27 : vector<16x128xf32>
    %cst_15 = arith.constant 9.99999997E-7 : f32
    %29 = vector.broadcast %cst_15 : f32 to vector<16x1xf32>
    %30 = arith.addf %26, %29 : vector<16x1xf32>
    %31 = math.rsqrt %30 : vector<16x1xf32>
    %32 = vector.broadcast %31 : vector<16x1xf32> to vector<16x128xf32>
    %33 = arith.mulf %28, %32 : vector<16x128xf32>
    %c0_16 = arith.constant 0 : index
    %c0_17 = arith.constant 0 : index
    %34 = vector.load %arg6[%c0_16, %c0_17] : memref<1x128xf32, #tpu.memory_space<vmem>>, vector<1x128xf32>
    %35 = vector.broadcast %34 : vector<1x128xf32> to vector<16x128xf32>
    %36 = arith.mulf %33, %35 : vector<16x128xf32>
    %c0_18 = arith.constant 0 : index
    %c0_19 = arith.constant 0 : index
    %37 = vector.load %arg7[%c0_18, %c0_19] : memref<1x128xf32, #tpu.memory_space<vmem>>, vector<1x128xf32>
    %38 = vector.broadcast %37 : vector<1x128xf32> to vector<16x128xf32>
    %39 = arith.addf %36, %38 : vector<16x128xf32>
    %c0_20 = arith.constant 0 : index
    %c0_21 = arith.constant 0 : index
    %40 = vector.load %arg8[%c0_20, %c0_21] : memref<16x128xf32, #tpu.memory_space<vmem>>, vector<16x128xf32>
    tpu.vector_store %arg8[%c0_20, %c0_21], %39 {strides = array<i32>} : memref<16x128xf32, #tpu.memory_space<vmem>>, vector<16x128xf32>,
    return
  }
  func.func @transform_0(%arg0: i32) -> (i32, i32) {
    %c0_i32 = arith.constant 0 : i32
    %c0_i32_0 = arith.constant 0 : i32
    return %arg0, %c0_i32 : i32, i32
  }
  func.func @transform_1(%arg0: i32) -> (i32, i32) {
    %c0_i32 = arith.constant 0 : i32
    %c0_i32_0 = arith.constant 0 : i32
    %c0_i32_1 = arith.constant 0 : i32
    return %c0_i32, %c0_i32_0 : i32, i32
  }
  func.func @transform_2(%arg0: i32) -> (i32, i32) {
    %c0_i32 = arith.constant 0 : i32
    %c0_i32_0 = arith.constant 0 : i32
    %c0_i32_1 = arith.constant 0 : i32
    return %c0_i32, %c0_i32_0 : i32, i32
  }
  func.func @transform_3(%arg0: i32) -> (i32, i32) {
    %c0_i32 = arith.constant 0 : i32
    %c0_i32_0 = arith.constant 0 : i32
    %c0_i32_1 = arith.constant 0 : i32
    return %c0_i32, %c0_i32_0 : i32, i32
  }
  func.func @transform_4(%arg0: i32) -> (i32, i32) {
    %c0_i32 = arith.constant 0 : i32
    %c0_i32_0 = arith.constant 0 : i32
    %c0_i32_1 = arith.constant 0 : i32
    return %c0_i32, %c0_i32_0 : i32, i32
  }
  func.func @transform_5(%arg0: i32) -> (i32, i32) {
    %c0_i32 = arith.constant 0 : i32
    %c0_i32_0 = arith.constant 0 : i32
    %c0_i32_1 = arith.constant 0 : i32
    return %c0_i32, %c0_i32_0 : i32, i32
  }
  func.func @transform_6(%arg0: i32) -> (i32, i32) {
    %c0_i32 = arith.constant 0 : i32
    %c0_i32_0 = arith.constant 0 : i32
    %c0_i32_1 = arith.constant 0 : i32
    return %c0_i32, %c0_i32_0 : i32, i32
  }
  func.func @transform_7(%arg0: i32) -> (i32, i32) {
    %c0_i32 = arith.constant 0 : i32
    %c0_i32_0 = arith.constant 0 : i32
    return %arg0, %c0_i32 : i32, i32
  }
}

</mosaic_0001>

<llo_original>
// kernel: tpu_custom_call.1
$region0: #{tpu_custom_call.1}
  #allocation0 [shape = 'u32[]', space=smem, size = 0x4, offset = 0x4, fixed_abs, tag = 'smem constant byte address 0x4 - core index']
  #allocation1 [shape = 'u32[144,128]{1,0:T(1,128)}', space=vmem, size = 0x12000, scoped, tag = 'internal scratch']
  %s0 = inlined_call_operand.hbm [shape: f32[16,128], index: 0, kind: input, shape index: {}]
  %s1 = inlined_call_operand.hbm [shape: bf16[128,128], index: 1, kind: input, shape index: {}]
  %s2 = inlined_call_operand.vmem [shape: f32[1,128], index: 2, kind: input, shape index: {}]
  %s3 = inlined_call_operand.hbm [shape: bf16[128,128], index: 3, kind: input, shape index: {}]
  %s4 = inlined_call_operand.vmem [shape: f32[1,128], index: 4, kind: input, shape index: {}]
  %s5 = inlined_call_operand.vmem [shape: f32[1,128], index: 5, kind: input, shape index: {}]
  %s6 = inlined_call_operand.vmem [shape: f32[1,128], index: 6, kind: input, shape index: {}]
  %s7 = inlined_call_operand.hbm [shape: f32[16,128], index: 7, kind: output, shape index: {}]
  %s8 = sld [smem:[#allocation0]]
  $region50: #{tpu_custom_call.1} parent=0
    _
  %s10 = ssub.s32 1, %s8
  %s11 = scalar_select 0, %s10, %s8
  $region1: #{tpu_custom_call.1} parent=0
    #allocation2 [shape = 'u8[8192]{0}', space=vmem, size = 0x2000, scoped, tag = 'input window, operand 0, single buffered']
    #allocation3 [shape = 's32[1]{0}', space=sflag, size = 0x4, scoped, tag = 'scoped memory for tpu_custom_call.1']
    #allocation4 [shape = 's32[1]{0}', space=sflag, size = 0x4, scoped, tag = 'scoped memory for tpu_custom_call.1']
    #allocation5 [shape = 'u8[32768]{0}', space=vmem, size = 0x8000, scoped, tag = 'input window, operand 1, single buffered']
    #allocation6 [shape = 's32[1]{0}', space=sflag, size = 0x4, scoped, tag = 'scoped memory for tpu_custom_call.1']
    #allocation7 [shape = 'u8[32768]{0}', space=vmem, size = 0x8000, scoped, tag = 'input window, operand 3, single buffered']
    #allocation8 [shape = 'u8[8192]{0}', space=vmem, size = 0x2000, scoped, tag = 'output window, operand 0, single buffered']
    %12 = vsyncpa [#allocation3], 0
    %13 = vsyncpa [#allocation6], 0
    %14 = vsyncpa [#allocation4], 0
    // Predicated region
    $region2: #{tpu_custom_call.1} parent=1 // pred_check
      _
    $region3: #{tpu_custom_call.1} parent=1 // pred_check_branch
      %16 = sbr.rel (0) target = $region5
    $region4: #{tpu_custom_call.1} parent=1 // pred_region
      %s18 = ssub.s32 256, 256
      %19 = vsyncadd [#allocation3], %s18
      %s20 = sshll.u32 [#allocation2], 4
      %s21 = int_to_ptr.vmem [resolvable:$true] %s20
      %26 = dma.hbm_to_vmem [thread:$0]  %s0, 256, %s21, [#allocation3], 128, 128, 8
    $region5: #{tpu_custom_call.1} parent=1 // pred_fallthru
      _
    // Predicated region
    $region6: #{tpu_custom_call.1} parent=1 // pred_check
      _
    $region7: #{tpu_custom_call.1} parent=1 // pred_check_branch
      %28 = sbr.rel (0) target = $region9
    $region8: #{tpu_custom_call.1} parent=1 // pred_region
      %s30 = ssub.s32 1024, 1024
      %31 = vsyncadd [#allocation6], %s30
      %s32 = sshll.u32 [#allocation5], 4
      %s33 = int_to_ptr.vmem [resolvable:$true] %s32
      %38 = dma.hbm_to_vmem [thread:$0]  %s1, 1024, %s33, [#allocation6], 64, 64, 4
    $region9: #{tpu_custom_call.1} parent=1 // pred_fallthru
      _
    // Predicated region
    $region10: #{tpu_custom_call.1} parent=1 // pred_check
      _
    $region11: #{tpu_custom_call.1} parent=1 // pred_check_branch
      %40 = sbr.rel (0) target = $region13
    $region12: #{tpu_custom_call.1} parent=1 // pred_region
      _
    $region13: #{tpu_custom_call.1} parent=1 // pred_fallthru
      _
    // Predicated region
    $region14: #{tpu_custom_call.1} parent=1 // pred_check
      _
    $region15: #{tpu_custom_call.1} parent=1 // pred_check_branch
      %42 = sbr.rel (0) target = $region17
    $region16: #{tpu_custom_call.1} parent=1 // pred_region
      %s44 = ssub.s32 1024, 1024
      %45 = vsyncadd [#allocation6], %s44
      %s46 = sshll.u32 [#allocation7], 4
      %s47 = int_to_ptr.vmem [resolvable:$true] %s46
      %52 = dma.hbm_to_vmem [thread:$0]  %s3, 1024, %s47, [#allocation6], 64, 64, 4
    $region17: #{tpu_custom_call.1} parent=1 // pred_fallthru
      _
    // Predicated region
    $region18: #{tpu_custom_call.1} parent=1 // pred_check
      _
    $region19: #{tpu_custom_call.1} parent=1 // pred_check_branch
      %54 = sbr.rel (0) target = $region21
    $region20: #{tpu_custom_call.1} parent=1 // pred_region
      _
    $region21: #{tpu_custom_call.1} parent=1 // pred_fallthru
      _
    // Predicated region
    $region22: #{tpu_custom_call.1} parent=1 // pred_check
      _
    $region23: #{tpu_custom_call.1} parent=1 // pred_check_branch
      %56 = sbr.rel (0) target = $region25
    $region24: #{tpu_custom_call.1} parent=1 // pred_region
      _
    $region25: #{tpu_custom_call.1} parent=1 // pred_fallthru
      _
    // Predicated region
    $region26: #{tpu_custom_call.1} parent=1 // pred_check
      _
    $region27: #{tpu_custom_call.1} parent=1 // pred_check_branch
      %58 = sbr.rel (0) target = $region29
    $region28: #{tpu_custom_call.1} parent=1 // pred_region
      _
    $region29: #{tpu_custom_call.1} parent=1 // pred_fallthru
      _
    // Predicated region
    $region30: #{tpu_custom_call.1} parent=1 // pred_check
      _
    $region31: #{tpu_custom_call.1} parent=1 // pred_check_branch
      %60 = sbr.rel (0) target = $region33
    $region32: #{tpu_custom_call.1} parent=1 // pred_region
      %61 = dma.done [#allocation3], 256
    $region33: #{tpu_custom_call.1} parent=1 // pred_fallthru
      _
    // Predicated region
    $region34: #{tpu_custom_call.1} parent=1 // pred_check
      _
    $region35: #{tpu_custom_call.1} parent=1 // pred_check_branch
      %63 = sbr.rel (0) target = $region37
    $region36: #{tpu_custom_call.1} parent=1 // pred_region
      %64 = dma.done [#allocation6], 1024
    $region37: #{tpu_custom_call.1} parent=1 // pred_fallthru
      _
    // Predicated region
    $region38: #{tpu_custom_call.1} parent=1 // pred_check
      _
    $region39: #{tpu_custom_call.1} parent=1 // pred_check_branch
      %66 = sbr.rel (0) target = $region41
    $region40: #{tpu_custom_call.1} parent=1 // pred_region
      %67 = dma.done [#allocation6], 1024
    $region41: #{tpu_custom_call.1} parent=1 // pred_fallthru
      _
    %v69 = vld [vmem:[#allocation2] sm:$0xff]
    %v70 = vld [vmem:[#allocation2 + $0x8] sm:$0xff]
    %v71 = vpack.c.bf16 %v70, %v69
    %v72 = vld [vmem:[#allocation5] sm:$0xf]
    %v73 = vld [vmem:[#allocation5 + $0x4] sm:$0xf]
    %v74 = vld [vmem:[#allocation5 + $0x8] sm:$0xf]
    %v75 = vld [vmem:[#allocation5 + $0xc] sm:$0xf]
    %v76 = vld [vmem:[#allocation5 + $0x10] sm:$0xf]
    %v77 = vld [vmem:[#allocation5 + $0x14] sm:$0xf]
    %v78 = vld [vmem:[#allocation5 + $0x18] sm:$0xf]
    %v79 = vld [vmem:[#allocation5 + $0x1c] sm:$0xf]
    %v80 = vld [vmem:[#allocation5 + $0x20] sm:$0xf]
    %v81 = vld [vmem:[#allocation5 + $0x24] sm:$0xf]
    %v82 = vld [vmem:[#allocation5 + $0x28] sm:$0xf]
    %v83 = vld [vmem:[#allocation5 + $0x2c] sm:$0xf]
    %v84 = vld [vmem:[#allocation5 + $0x30] sm:$0xf]
    %v85 = vld [vmem:[#allocation5 + $0x34] sm:$0xf]
    %v86 = vld [vmem:[#allocation5 + $0x38] sm:$0xf]
    %v87 = vld [vmem:[#allocation5 + $0x3c] sm:$0xf]
    %v88 = vld [vmem:[%s2] sm:$0x1]
    %v90 = vlaneseq
    %v91 = vshrl.u32 %v90, 7
    %v92 = vsub.s32 0, %v91
    %v93 = vrot.slane %v88, %v92
    %v111 = vunpack.c.l.b16 %v72
    %v112 = vunpack.c.l.b16 %v73
    %v113 = vunpack.c.l.b16 %v74
    %v114 = vunpack.c.l.b16 %v75
    %v115 = vunpack.c.l.b16 %v76
    %v116 = vunpack.c.l.b16 %v77
    %v117 = vunpack.c.l.b16 %v78
    %v118 = vunpack.c.l.b16 %v79
    %v119 = vunpack.c.l.b16 %v80
    %v120 = vunpack.c.l.b16 %v81
    %v121 = vunpack.c.l.b16 %v82
    %v122 = vunpack.c.l.b16 %v83
    %v123 = vunpack.c.l.b16 %v84
    %v124 = vunpack.c.l.b16 %v85
    %v125 = vunpack.c.l.b16 %v86
    %v126 = vunpack.c.l.b16 %v87
    %v127 = vpack.c.b16 %v112, %v111
    %v128 = vpack.c.b16 %v114, %v113
    %v129 = vpack.c.b16 %v116, %v115
    %v130 = vpack.c.b16 %v118, %v117
    %v131 = vpack.c.b16 %v120, %v119
    %v132 = vpack.c.b16 %v122, %v121
    %v133 = vpack.c.b16 %v124, %v123
    %v134 = vpack.c.b16 %v126, %v125
    %143 = vmatprep.subr.bf16.mxu0 0
    %144 = vmatpush1.bf16.msra.mxu0 %v134
    %145 = vmatprep.subr.bf16.mxu0 0
    %146 = vmatpush1.bf16.msra.mxu0 %v133
    %147 = vmatprep.subr.bf16.mxu0 0
    %148 = vmatpush1.bf16.msra.mxu0 %v132
    %149 = vmatprep.subr.bf16.mxu0 0
    %150 = vmatpush1.bf16.msra.mxu0 %v131
    %151 = vmatprep.subr.bf16.mxu0 0
    %152 = vmatpush1.bf16.msra.mxu0 %v130
    %153 = vmatprep.subr.bf16.mxu0 0
    %154 = vmatpush1.bf16.msra.mxu0 %v129
    %155 = vmatprep.subr.bf16.mxu0 0
    %156 = vmatpush1.bf16.msra.mxu0 %v128
    %157 = vmatprep.subr.bf16.mxu0 0
    %158 = vmatpush1.bf16.msra.mxu0 %v127
    %159 = vmatprep.subr.bf16.mxu0 0
    %160 = vmatpush2.bf16.msra.mxu0 0
    %161 = vmatprep.subr.bf16.mxu0 0
    %162 = vmatpush2.bf16.msra.mxu0 0
    %163 = vmatprep.subr.bf16.mxu0 0
    %164 = vmatpush2.bf16.msra.mxu0 0
    %165 = vmatprep.subr.bf16.mxu0 0
    %166 = vmatpush2.bf16.msra.mxu0 0
    %167 = vmatprep.subr.bf16.mxu0 0
    %168 = vmatpush2.bf16.msra.mxu0 0
    %169 = vmatprep.subr.bf16.mxu0 0
    %170 = vmatpush2.bf16.msra.mxu0 0
    %171 = vmatprep.subr.bf16.mxu0 0
    %172 = vmatpush2.bf16.msra.mxu0 0
    %173 = vmatprep.subr.bf16.mxu0 0
    %174 = vmatpush2.bf16.msra.mxu0 0
    %175 = vmatprep.mubr.bf16.mxu0 0
    %176 = vmatmul.mubr.bf16.gmra.mxu0 %v71
    %v177 = vpop.f32.mrf.mxu0
    %v178 = vadd.f32 %v93, %v177
    %v179 = vpop.f32.mrf.mxu0
    %v180 = vpop.f32.mrf.mxu0
    %v181 = vadd.f32 %v93, %v180
    %v182 = vpop.f32.mrf.mxu0
    %183 = vdwg.mxu0
    %v184 = vmax.f32 %v178, 0.0
    %v185 = vmax.f32 %v181, 0.0
    %v186 = vpack.c.bf16 %v185, %v184
    %v187 = vld [vmem:[#allocation7] sm:$0xf]
    %v188 = vld [vmem:[#allocation7 + $0x4] sm:$0xf]
    %v189 = vld [vmem:[#allocation7 + $0x8] sm:$0xf]
    %v190 = vld [vmem:[#allocation7 + $0xc] sm:$0xf]
    %v191 = vld [vmem:[#allocation7 + $0x10] sm:$0xf]
    %v192 = vld [vmem:[#allocation7 + $0x14] sm:$0xf]
    %v193 = vld [vmem:[#allocation7 + $0x18] sm:$0xf]
    %v194 = vld [vmem:[#allocation7 + $0x1c] sm:$0xf]
    %v195 = vld [vmem:[#allocation7 + $0x20] sm:$0xf]
    %v196 = vld [vmem:[#allocation7 + $0x24] sm:$0xf]
    %v197 = vld [vmem:[#allocation7 + $0x28] sm:$0xf]
    %v198 = vld [vmem:[#allocation7 + $0x2c] sm:$0xf]
    %v199 = vld [vmem:[#allocation7 + $0x30] sm:$0xf]
    %v200 = vld [vmem:[#allocation7 + $0x34] sm:$0xf]
    %v201 = vld [vmem:[#allocation7 + $0x38] sm:$0xf]
    %v202 = vld [vmem:[#allocation7 + $0x3c] sm:$0xf]
    %v203 = vld [vmem:[%s4] sm:$0x1]
    %v205 = vlaneseq
    %v206 = vshrl.u32 %v205, 7
    %v207 = vsub.s32 0, %v206
    %v208 = vrot.slane %v203, %v207
    %v226 = vunpack.c.l.b16 %v187
    %v227 = vunpack.c.l.b16 %v188
    %v228 = vunpack.c.l.b16 %v189
    %v229 = vunpack.c.l.b16 %v190
    %v230 = vunpack.c.l.b16 %v191
    %v231 = vunpack.c.l.b16 %v192
    %v232 = vunpack.c.l.b16 %v193
    %v233 = vunpack.c.l.b16 %v194
    %v234 = vunpack.c.l.b16 %v195
    %v235 = vunpack.c.l.b16 %v196
    %v236 = vunpack.c.l.b16 %v197
    %v237 = vunpack.c.l.b16 %v198
    %v238 = vunpack.c.l.b16 %v199
    %v239 = vunpack.c.l.b16 %v200
    %v240 = vunpack.c.l.b16 %v201
    %v241 = vunpack.c.l.b16 %v202
    %v242 = vpack.c.b16 %v227, %v226
    %v243 = vpack.c.b16 %v229, %v228
    %v244 = vpack.c.b16 %v231, %v230
    %v245 = vpack.c.b16 %v233, %v232
    %v246 = vpack.c.b16 %v235, %v234
    %v247 = vpack.c.b16 %v237, %v236
    %v248 = vpack.c.b16 %v239, %v238
    %v249 = vpack.c.b16 %v241, %v240
    %258 = vmatprep.subr.bf16.mxu0 0
    %259 = vmatpush1.bf16.msra.mxu0 %v249
    %260 = vmatprep.subr.bf16.mxu0 0
    %261 = vmatpush1.bf16.msra.mxu0 %v248
    %262 = vmatprep.subr.bf16.mxu0 0
    %263 = vmatpush1.bf16.msra.mxu0 %v247
    %264 = vmatprep.subr.bf16.mxu0 0
    %265 = vmatpush1.bf16.msra.mxu0 %v246
    %266 = vmatprep.subr.bf16.mxu0 0
    %267 = vmatpush1.bf16.msra.mxu0 %v245
    %268 = vmatprep.subr.bf16.mxu0 0
    %269 = vmatpush1.bf16.msra.mxu0 %v244
    %270 = vmatprep.subr.bf16.mxu0 0
    %271 = vmatpush1.bf16.msra.mxu0 %v243
    %272 = vmatprep.subr.bf16.mxu0 0
    %273 = vmatpush1.bf16.msra.mxu0 %v242
    %274 = vmatprep.subr.bf16.mxu0 0
    %275 = vmatpush2.bf16.msra.mxu0 0
    %276 = vmatprep.subr.bf16.mxu0 0
    %277 = vmatpush2.bf16.msra.mxu0 0
    %278 = vmatprep.subr.bf16.mxu0 0
    %279 = vmatpush2.bf16.msra.mxu0 0
    %280 = vmatprep.subr.bf16.mxu0 0
    %281 = vmatpush2.bf16.msra.mxu0 0
    %282 = vmatprep.subr.bf16.mxu0 0
    %283 = vmatpush2.bf16.msra.mxu0 0
    %284 = vmatprep.subr.bf16.mxu0 0
    %285 = vmatpush2.bf16.msra.mxu0 0
    %286 = vmatprep.subr.bf16.mxu0 0
    %287 = vmatpush2.bf16.msra.mxu0 0
    %288 = vmatprep.subr.bf16.mxu0 0
    %289 = vmatpush2.bf16.msra.mxu0 0
    %290 = vmatprep.mubr.bf16.mxu0 0
    %291 = vmatmul.mubr.bf16.gmra.mxu0 %v186
    %v292 = vpop.f32.mrf.mxu0
    %v293 = vadd.f32 %v208, %v292
    %v294 = vpop.f32.mrf.mxu0
    %v295 = vpop.f32.mrf.mxu0
    %v296 = vadd.f32 %v208, %v295
    %v297 = vpop.f32.mrf.mxu0
    %298 = vdwg.mxu0
    %v299 = vadd.f32 %v293, %v69
    %v300 = vadd.f32 %v296, %v70
    %301 = vadd.xlane.f32.xlu0 %v299
    %v302 = vpop.xlane.xlu0 %301
    %303 = vadd.xlane.f32.xlu0 %v300
    %v304 = vpop.xlane.xlu0 %303
    %v305 = vmul.f32 %v302, 0.03125
    %v306 = vmul.f32 %v304, 0.03125
    %v307 = vmul.f32 %v299, %v299
    %v308 = vmul.f32 %v300, %v300
    %309 = vadd.xlane.f32.xlu0 %v307
    %v310 = vpop.xlane.xlu0 %309
    %311 = vadd.xlane.f32.xlu0 %v308
    %v312 = vpop.xlane.xlu0 %311
    %v313 = vmul.f32 %v310, 0.03125
    %v314 = vmul.f32 %v312, 0.03125
    %v315 = vmul.f32 %v305, %v305
    %v316 = vmul.f32 %v306, %v306
    %v317 = vsub.f32 %v313, %v315
    %v318 = vsub.f32 %v314, %v316
    %v319 = vsub.f32 %v299, %v305
    %v320 = vsub.f32 %v300, %v306
    %v321 = vadd.f32 %v317, 1e-06
    %v322 = vadd.f32 %v318, 1e-06
    %v323 = vrsqrt.pop %v321
    %v324 = vrsqrt.pop %v322
    %v325 = vmul.f32 %v319, %v323
    %v326 = vmul.f32 %v320, %v324
    %v327 = vld [vmem:[%s5] sm:$0x1]
    %v329 = vlaneseq
    %v330 = vshrl.u32 %v329, 7
    %v331 = vsub.s32 0, %v330
    %v332 = vrot.slane %v327, %v331
    %v334 = vmul.f32 %v325, %v332
    %v335 = vmul.f32 %v326, %v332
    %v336 = vld [vmem:[%s6] sm:$0x1]
    %v338 = vlaneseq
    %v339 = vshrl.u32 %v338, 7
    %v340 = vsub.s32 0, %v339
    %v341 = vrot.slane %v336, %v340
    %v343 = vadd.f32 %v334, %v341
    %v344 = vadd.f32 %v335, %v341
    %345 = vst [vmem:[#allocation8] sm:$0xff] %v343
    %346 = vst [vmem:[#allocation8 + $0x8] sm:$0xff] %v344
    // Predicated region
    $region42: #{tpu_custom_call.1} parent=1 // pred_check
      _
    $region43: #{tpu_custom_call.1} parent=1 // pred_check_branch
      %348 = sbr.rel (0) target = $region45
    $region44: #{tpu_custom_call.1} parent=1 // pred_region
      %s350 = ssub.s32 256, 256
      %351 = vsyncadd [#allocation4], %s350
      %s352 = sshll.u32 [#allocation8], 4
      %s353 = int_to_ptr.vmem [resolvable:$true] %s352
      %358 = dma.vmem_to_hbm [thread:$0]  %s353, 256, %s7, [#allocation4], 128, 128, 8
    $region45: #{tpu_custom_call.1} parent=1 // pred_fallthru
      _
    // Predicated region
    $region46: #{tpu_custom_call.1} parent=1 // pred_check
      _
    $region47: #{tpu_custom_call.1} parent=1 // pred_check_branch
      %360 = sbr.rel (0) target = $region49
    $region48: #{tpu_custom_call.1} parent=1 // pred_region
      %361 = dma.done [#allocation4], 256
    $region49: #{tpu_custom_call.1} parent=1 // pred_fallthru
      _
    %362 = vsyncpa [#allocation3], 1
    %363 = vsyncpa [#allocation6], 1
    %364 = vsyncpa [#allocation4], 1

</llo_original>
